<compile_context>
chip_gen: v5e
topology: v5e:2x2
jax: 0.10.0
libtpu: 0.0.40
codegen_flags: <defaults>
</compile_context>

<pallas_src>
import functools

import jax
import jax.numpy as jnp
from jax import lax
from jax.experimental import pallas as pl
from jax.experimental.pallas import tpu as pltpu

EPS = 1e-5


def _round_up(x, m):
    return ((x + m - 1) // m) * m


def _cdiv(a, b):
    return (a + b - 1) // b


def _vmem_capacity_bytes():
    try:
        cap = getattr(pltpu.get_tpu_info(), "vmem_capacity_bytes", None)
        if cap:
            return int(cap)
    except Exception:
        pass
    return 64 * 1024 * 1024  # conservative fallback (v7x-class VMEM)


def prenorm_kernel(x_ref, gamma_ref, beta_ref, wt_ref, b_ref, o_ref, normed_ref):
    # grid = (row tiles "parallel", weight-column tiles "arbitrary").
    # LayerNorm is computed once per row tile (j == 0) into VMEM scratch and
    # reused across all weight-column tiles.
    @pl.when(pl.program_id(1) == 0)
    def _():
        x = x_ref[...].astype(jnp.float32)
        # Two independent lane reductions (E[x], E[x^2]) -> biased variance,
        # matching torch.nn.LayerNorm; all LN math in f32.
        mean = jnp.mean(x, axis=-1, keepdims=True)
        mean_sq = jnp.mean(x * x, axis=-1, keepdims=True)
        var = jnp.maximum(mean_sq - mean * mean, 0.0)
        inv = lax.rsqrt(var + EPS)
        normed = (x - mean) * inv * gamma_ref[...] + beta_ref[...]
        normed_ref[...] = normed.astype(normed_ref.dtype)

    # fn(.) = Linear(D, D): y = normed @ W^T + b.  W is pre-transposed in the
    # wrapper, so this is a plain (TM, K) @ (K, TN) MXU matmul (no per-step
    # XLU transpose of the weight), f32 accumulation.
    y = lax.dot_general(
        normed_ref[...],
        wt_ref[...],
        dimension_numbers=(((1,), (0,)), ((), ())),
        preferred_element_type=jnp.float32,
    )
    o_ref[...] = (y + b_ref[...]).astype(o_ref.dtype)


def _choose_tiles(M, D, x_bytes, w_bytes, vmem_budget):
    # Sublane packing for the streamed row tiles: 8 (32-bit), 16 (bf16), 32 (8-bit).
    sublane = max(8, 32 // x_bytes)

    # --- Output-feature (column) tiling: keep the whole weight resident when it
    # comfortably fits; otherwise stream (D, TN) column blocks (large-D / v7x path).
    if D <= 256 or D * D * w_bytes <= vmem_budget // 3:
        TN = D
        w_bufs = 1          # resident weight -> single buffer
    else:
        TN = 512 if D >= 512 else D
        while TN > 128 and 2 * D * TN * w_bytes > vmem_budget // 3:
            TN //= 2
        w_bufs = 2          # streamed weight columns -> double buffer

    def vmem_use(tm):
        x_io = 2 * tm * D * x_bytes              # double-buffered input tile
        o_io = 2 * tm * TN * x_bytes             # double-buffered output tile
        w_res = w_bufs * D * TN * w_bytes        # weight block(s)
        scratch = tm * D * w_bytes               # normed VMEM scratch
        f32_tmp = 2 * tm * D * 4 + tm * TN * 4   # f32 x / LN temps + f32 matmul result
        params = 4 * D * 4                       # gamma/beta/bias (f32)
        return x_io + o_io + w_res + scratch + f32_tmp + params

    TM = 2048
    while TM > sublane and vmem_use(TM) > vmem_budget:
        TM //= 2

    # Balance row tiles (tiny ragged tail instead of up to TM-1 wasted rows) and
    # keep >= 2 row tiles when M allows so both v7x TensorCores get work; on
    # single-TC chips the extra grid step costs ~0.35 us.
    min_tiles = 2 if M >= 2 * sublane else 1
    nt = max(_cdiv(M, TM), min_tiles)
    TM = _round_up(_cdiv(M, nt), sublane)
    return TM, TN, w_bufs


@functools.partial(jax.jit, static_argnums=(5,))
def _prenorm_impl(x, gamma, beta, w, b, single_buffer_params):
    B, N, D = x.shape
    M = B * N
    x2 = x.reshape(M, D)

    x_bytes = jnp.dtype(x.dtype).itemsize
    w_bytes = jnp.dtype(w.dtype).itemsize

    vmem_cap = _vmem_capacity_bytes()            # 128 MiB v5e/v6e, 64 MiB v7x
    vmem_budget = int(vmem_cap * 0.70)
    vmem_limit = int(vmem_cap * 0.85)

    TM, TN, w_bufs = _choose_tiles(M, D, x_bytes, w_bytes, vmem_budget)
    grid = (_cdiv(M, TM), _cdiv(D, TN))
    nc = grid[1]

    # One-time prep outside the kernel (once per call, negligible vs per-tile work):
    #  - weight pre-transposed to (in, out) so the kernel runs a plain MN matmul,
    #  - LayerNorm affine + Linear bias cast to f32 once (not per grid step).
    w_t = w.T
    gamma2 = gamma.reshape(1, D).astype(jnp.float32)
    beta2 = beta.reshape(1, D).astype(jnp.float32)
    b2 = b.reshape(1, D).astype(jnp.float32)

    resident_mode = {"pipeline_mode": pl.Buffered(1)} if single_buffer_params else {}
    weight_mode = (
        {"pipeline_mode": pl.Buffered(1)}
        if (single_buffer_params and w_bufs == 1 and nc == 1)
        else {}
    )

    flops = 2 * M * D * D + 10 * M * D
    bytes_accessed = 2 * M * D * x_bytes + D * D * w_bytes + 3 * D * 4
    cost = pl.CostEstimate(flops=flops, transcendentals=M,
                           bytes_accessed=bytes_accessed)

    # TODO(synk): for D < 128 (e.g. the demo D=32) lanes/MXU are under-filled;
    # realistic model dims (multiples of 128) are already lane-dense.
    out = pl.pallas_call(
        prenorm_kernel,
        out_shape=jax.ShapeDtypeStruct((M, D), x.dtype),
        grid_spec=pltpu.PrefetchScalarGridSpec(
            num_scalar_prefetch=0,
            grid=grid,
            in_specs=[
                pl.BlockSpec((TM, D), lambda i, j: (i, 0)),                   # x rows (streamed)
                pl.BlockSpec((1, D), lambda i, j: (0, 0), **resident_mode),   # gamma (resident)
                pl.BlockSpec((1, D), lambda i, j: (0, 0), **resident_mode),   # beta  (resident)
                pl.BlockSpec((D, TN), lambda i, j: (0, j), **weight_mode),    # W^T column block
                pl.BlockSpec((1, TN), lambda i, j: (0, j), **weight_mode),    # bias column block
            ],
            out_specs=pl.BlockSpec((TM, TN), lambda i, j: (i, j)),
            scratch_shapes=[pltpu.VMEM((TM, D), w.dtype)],                    # normed, reused over j
        ),
        compiler_params=pltpu.CompilerParams(
            dimension_semantics=("parallel", "arbitrary"),
            vmem_limit_bytes=vmem_limit,
        ),
        cost_estimate=cost,
    )(x2, gamma2, beta2, w_t, b2)

    return out.reshape(B, N, D)


def prenorm(x, gamma, beta, w, b):
    """PreNorm forward: Linear(LayerNorm(x)) for x of shape (B, N, D)."""
    try:
        return _prenorm_impl(x, gamma, beta, w, b, True)
    except Exception:
        # Fallback for jax builds that reject BlockSpec(pipeline_mode=pl.Buffered(1)).
        return _prenorm_impl(x, gamma, beta, w, b, False)


def prenorm_ref(x, gamma, beta, w, b):
    mean = jnp.mean(x, axis=-1, keepdims=True)
    var = jnp.mean((x - mean) ** 2, axis=-1, keepdims=True)
    normed = (x - mean) / jnp.sqrt(var + EPS) * gamma + beta
    return jnp.einsum("bnd,ed->bne", normed, w) + b


if __name__ == "__main__":
    B, N, D = 2, 8, 32

    key = jax.random.PRNGKey(0)
    kx, kg, kb, kw, kbias = jax.random.split(key, 5)

    x = jax.random.normal(kx, (B, N, D), dtype=jnp.float32)

    # LayerNorm params (PyTorch init gamma=1, beta=0; perturbed so the affine path
    # is actually exercised).
    gamma = jnp.ones((D,), jnp.float32) + 0.1 * jax.random.normal(kg, (D,), jnp.float32)
    beta = 0.1 * jax.random.normal(kb, (D,), jnp.float32)

    # fn = Linear(D, D) params in PyTorch (out_features, in_features) layout.
    w = jax.random.normal(kw, (D, D), dtype=jnp.float32) / jnp.sqrt(D)
    b = 0.1 * jax.random.normal(kbias, (D,), dtype=jnp.float32)

    out = prenorm(x, gamma, beta, w, b)
    jax.block_until_ready(out)

    ref = prenorm_ref(x, gamma, beta, w, b)
    assert out.shape == (B, N, D)
    assert jnp.allclose(out, ref, atol=1e-4, rtol=1e-4), "mismatch vs reference"

    print("KERNEL_OK")
</pallas_src>

<mosaic_0001>
module attributes {stable_mosaic.version = 11 : i64} {
  func.func @prenorm_kernel(%arg0: i32, %arg1: i32, %arg2: memref<8x32xf32, #tpu.memory_space<vmem>>, %arg3: memref<1x32xf32, #tpu.memory_space<vmem>>, %arg4: memref<1x32xf32, #tpu.memory_space<vmem>>, %arg5: memref<32x32xf32, #tpu.memory_space<vmem>>, %arg6: memref<1x32xf32, #tpu.memory_space<vmem>>, %arg7: memref<8x32xf32, #tpu.memory_space<vmem>>, %arg8: memref<8x32xf32, #tpu.memory_space<vmem>>) attributes {dimension_semantics = [#tpu.dimension_semantics<parallel>, #tpu.dimension_semantics<arbitrary>], iteration_bounds = array<i64: 2, 1>, scalar_prefetch = 0 : i64, scratch_operands = 1 : i64, tpu.core_type = #tpu.core_type<tc>, window_params = [{transform_indices = @transform_0, window_bounds = array<i64: 8, 32>}, {pipeline_mode = #tpu.pipeline_mode<synchronous>, transform_indices = @transform_1, window_bounds = array<i64: 1, 32>}, {pipeline_mode = #tpu.pipeline_mode<synchronous>, transform_indices = @transform_2, window_bounds = array<i64: 1, 32>}, {pipeline_mode = #tpu.pipeline_mode<synchronous>, transform_indices = @transform_3, window_bounds = array<i64: 32, 32>}, {pipeline_mode = #tpu.pipeline_mode<synchronous>, transform_indices = @transform_4, window_bounds = array<i64: 1, 32>}, {transform_indices = @transform_5, window_bounds = array<i64: 8, 32>}]} {
    %c0_i32 = arith.constant 0 : i32
    %0 = arith.cmpi eq, %arg1, %c0_i32 : i32
    %1 = arith.extui %0 : i1 to i32
    %c0_i32_0 = arith.constant 0 : i32
    %2 = arith.cmpi ne, %1, %c0_i32_0 : i32
    scf.if %2 {
      %c0_8 = arith.constant 0 : index
      %c0_9 = arith.constant 0 : index
      %10 = vector.load %arg2[%c0_8, %c0_9] : memref<8x32xf32, #tpu.memory_space<vmem>>, vector<8x32xf32>
      %cst_10 = arith.constant dense<0.000000e+00> : vector<8xf32>
      %11 = vector.multi_reduction <add>, %10, %cst_10 [1] : vector<8x32xf32> to vector<8xf32>
      %12 = vector.shape_cast %11 : vector<8xf32> to vector<8x1xf32>
      %cst_11 = arith.constant 3.200000e+01 : f32
      %13 = vector.broadcast %cst_11 : f32 to vector<8x1xf32>
      %14 = arith.divf %12, %13 : vector<8x1xf32>
      %15 = arith.mulf %10, %10 : vector<8x32xf32>
      %cst_12 = arith.constant dense<0.000000e+00> : vector<8xf32>
      %16 = vector.multi_reduction <add>, %15, %cst_12 [1] : vector<8x32xf32> to vector<8xf32>
      %17 = vector.shape_cast %16 : vector<8xf32> to vector<8x1xf32>
      %cst_13 = arith.constant 3.200000e+01 : f32
      %18 = vector.broadcast %cst_13 : f32 to vector<8x1xf32>
      %19 = arith.divf %17, %18 : vector<8x1xf32>
      %20 = arith.mulf %14, %14 : vector<8x1xf32>
      %21 = arith.subf %19, %20 : vector<8x1xf32>
      %cst_14 = arith.constant 0.000000e+00 : f32
      %22 = vector.broadcast %cst_14 : f32 to vector<8x1xf32>
      %23 = arith.maximumf %21, %22 : vector<8x1xf32>
      %cst_15 = arith.constant 9.99999974E-6 : f32
      %24 = vector.broadcast %cst_15 : f32 to vector<8x1xf32>
      %25 = arith.addf %23, %24 : vector<8x1xf32>
      %26 = math.rsqrt %25 : vector<8x1xf32>
      %27 = vector.broadcast %14 : vector<8x1xf32> to vector<8x32xf32>
      %28 = arith.subf %10, %27 : vector<8x32xf32>
      %29 = vector.broadcast %26 : vector<8x1xf32> to vector<8x32xf32>
      %30 = arith.mulf %28, %29 : vector<8x32xf32>
      %c0_16 = arith.constant 0 : index
      %c0_17 = arith.constant 0 : index
      %31 = vector.load %arg3[%c0_16, %c0_17] : memref<1x32xf32, #tpu.memory_space<vmem>>, vector<1x32xf32>
      %32 = vector.broadcast %31 : vector<1x32xf32> to vector<8x32xf32>
      %33 = arith.mulf %30, %32 : vector<8x32xf32>
      %c0_18 = arith.constant 0 : index
      %c0_19 = arith.constant 0 : index
      %34 = vector.load %arg4[%c0_18, %c0_19] : memref<1x32xf32, #tpu.memory_space<vmem>>, vector<1x32xf32>
      %35 = vector.broadcast %34 : vector<1x32xf32> to vector<8x32xf32>
      %36 = arith.addf %33, %35 : vector<8x32xf32>
      %c0_20 = arith.constant 0 : index
      %c0_21 = arith.constant 0 : index
      %37 = vector.load %arg8[%c0_20, %c0_21] : memref<8x32xf32, #tpu.memory_space<vmem>>, vector<8x32xf32>
      tpu.vector_store %arg8[%c0_20, %c0_21], %36 {strides = array<i32>} : memref<8x32xf32, #tpu.memory_space<vmem>>, vector<8x32xf32>,
    } else {
    }
    %c0 = arith.constant 0 : index
    %c0_1 = arith.constant 0 : index
    %3 = vector.load %arg8[%c0, %c0_1] : memref<8x32xf32, #tpu.memory_space<vmem>>, vector<8x32xf32>
    %c0_2 = arith.constant 0 : index
    %c0_3 = arith.constant 0 : index
    %4 = vector.load %arg5[%c0_2, %c0_3] : memref<32x32xf32, #tpu.memory_space<vmem>>, vector<32x32xf32>
    %cst = arith.constant dense<0.000000e+00> : vector<8x32xf32>
    %5 = tpu.matmul %3, %4, %cst {dimension_numbers = #tpu.dot_dimension_numbers<[1], [0], [0], [1], [0, 0, 1, 1], [], []>} : vector<8x32xf32>, vector<32x32xf32>, vector<8x32xf32> -> vector<8x32xf32>
    %c0_4 = arith.constant 0 : index
    %c0_5 = arith.constant 0 : index
    %6 = vector.load %arg6[%c0_4, %c0_5] : memref<1x32xf32, #tpu.memory_space<vmem>>, vector<1x32xf32>
    %7 = vector.broadcast %6 : vector<1x32xf32> to vector<8x32xf32>
    %8 = arith.addf %5, %7 : vector<8x32xf32>
    %c0_6 = arith.constant 0 : index
    %c0_7 = arith.constant 0 : index
    %9 = vector.load %arg7[%c0_6, %c0_7] : memref<8x32xf32, #tpu.memory_space<vmem>>, vector<8x32xf32>
    tpu.vector_store %arg7[%c0_6, %c0_7], %8 {strides = array<i32>} : memref<8x32xf32, #tpu.memory_space<vmem>>, vector<8x32xf32>,
    return
  }
  func.func @transform_0(%arg0: i32, %arg1: i32) -> (i32, i32) {
    %c0_i32 = arith.constant 0 : i32
    %c0_i32_0 = arith.constant 0 : i32
    return %arg0, %c0_i32 : i32, i32
  }
  func.func @transform_1(%arg0: i32, %arg1: i32) -> (i32, i32) {
    %c0_i32 = arith.constant 0 : i32
    %c0_i32_0 = arith.constant 0 : i32
    %c0_i32_1 = arith.constant 0 : i32
    return %c0_i32, %c0_i32_0 : i32, i32
  }
  func.func @transform_2(%arg0: i32, %arg1: i32) -> (i32, i32) {
    %c0_i32 = arith.constant 0 : i32
    %c0_i32_0 = arith.constant 0 : i32
    %c0_i32_1 = arith.constant 0 : i32
    return %c0_i32, %c0_i32_0 : i32, i32
  }
  func.func @transform_3(%arg0: i32, %arg1: i32) -> (i32, i32) {
    %c0_i32 = arith.constant 0 : i32
    %c0_i32_0 = arith.constant 0 : i32
    return %c0_i32, %arg1 : i32, i32
  }
  func.func @transform_4(%arg0: i32, %arg1: i32) -> (i32, i32) {
    %c0_i32 = arith.constant 0 : i32
    %c0_i32_0 = arith.constant 0 : i32
    return %c0_i32, %arg1 : i32, i32
  }
  func.func @transform_5(%arg0: i32, %arg1: i32) -> (i32, i32) {
    %c0_i32 = arith.constant 0 : i32
    return %arg0, %arg1 : i32, i32
  }
}

module attributes {stable_mosaic.version = 11 : i64} {
  func.func @prenorm_kernel(%arg0: i32, %arg1: i32, %arg2: memref<8x32xf32, #tpu.memory_space<vmem>>, %arg3: memref<1x32xf32, #tpu.memory_space<vmem>>, %arg4: memref<1x32xf32, #tpu.memory_space<vmem>>, %arg5: memref<32x32xf32, #tpu.memory_space<vmem>>, %arg6: memref<1x32xf32, #tpu.memory_space<vmem>>, %arg7: memref<8x32xf32, #tpu.memory_space<vmem>>, %arg8: memref<8x32xf32, #tpu.memory_space<vmem>>) attributes {dimension_semantics = [#tpu.dimension_semantics<parallel>, #tpu.dimension_semantics<arbitrary>], iteration_bounds = array<i64: 2, 1>, scalar_prefetch = 0 : i64, scratch_operands = 1 : i64, tpu.core_type = #tpu.core_type<tc>, window_params = [{transform_indices = @transform_0, window_bounds = array<i64: 8, 32>}, {pipeline_mode = #tpu.pipeline_mode<synchronous>, transform_indices = @transform_1, window_bounds = array<i64: 1, 32>}, {pipeline_mode = #tpu.pipeline_mode<synchronous>, transform_indices = @transform_2, window_bounds = array<i64: 1, 32>}, {transform_indices = @transform_3, window_bounds = array<i64: 32, 32>}, {transform_indices = @transform_4, window_bounds = array<i64: 1, 32>}, {transform_indices = @transform_5, window_bounds = array<i64: 8, 32>}]} {
    %c0_i32 = arith.constant 0 : i32
    %0 = arith.cmpi eq, %arg1, %c0_i32 : i32
    %1 = arith.extui %0 : i1 to i32
    %c0_i32_0 = arith.constant 0 : i32
    %2 = arith.cmpi ne, %1, %c0_i32_0 : i32
    scf.if %2 {
      %c0_8 = arith.constant 0 : index
      %c0_9 = arith.constant 0 : index
      %10 = vector.load %arg2[%c0_8, %c0_9] : memref<8x32xf32, #tpu.memory_space<vmem>>, vector<8x32xf32>
      %cst_10 = arith.constant dense<0.000000e+00> : vector<8xf32>
      %11 = vector.multi_reduction <add>, %10, %cst_10 [1] : vector<8x32xf32> to vector<8xf32>
      %12 = vector.shape_cast %11 : vector<8xf32> to vector<8x1xf32>
      %cst_11 = arith.constant 3.200000e+01 : f32
      %13 = vector.broadcast %cst_11 : f32 to vector<8x1xf32>
      %14 = arith.divf %12, %13 : vector<8x1xf32>
      %15 = arith.mulf %10, %10 : vector<8x32xf32>
      %cst_12 = arith.constant dense<0.000000e+00> : vector<8xf32>
      %16 = vector.multi_reduction <add>, %15, %cst_12 [1] : vector<8x32xf32> to vector<8xf32>
      %17 = vector.shape_cast %16 : vector<8xf32> to vector<8x1xf32>
      %cst_13 = arith.constant 3.200000e+01 : f32
      %18 = vector.broadcast %cst_13 : f32 to vector<8x1xf32>
      %19 = arith.divf %17, %18 : vector<8x1xf32>
      %20 = arith.mulf %14, %14 : vector<8x1xf32>
      %21 = arith.subf %19, %20 : vector<8x1xf32>
      %cst_14 = arith.constant 0.000000e+00 : f32
      %22 = vector.broadcast %cst_14 : f32 to vector<8x1xf32>
      %23 = arith.maximumf %21, %22 : vector<8x1xf32>
      %cst_15 = arith.constant 9.99999974E-6 : f32
      %24 = vector.broadcast %cst_15 : f32 to vector<8x1xf32>
      %25 = arith.addf %23, %24 : vector<8x1xf32>
      %26 = math.rsqrt %25 : vector<8x1xf32>
      %27 = vector.broadcast %14 : vector<8x1xf32> to vector<8x32xf32>
      %28 = arith.subf %10, %27 : vector<8x32xf32>
      %29 = vector.broadcast %26 : vector<8x1xf32> to vector<8x32xf32>
      %30 = arith.mulf %28, %29 : vector<8x32xf32>
      %c0_16 = arith.constant 0 : index
      %c0_17 = arith.constant 0 : index
      %31 = vector.load %arg3[%c0_16, %c0_17] : memref<1x32xf32, #tpu.memory_space<vmem>>, vector<1x32xf32>
      %32 = vector.broadcast %31 : vector<1x32xf32> to vector<8x32xf32>
      %33 = arith.mulf %30, %32 : vector<8x32xf32>
      %c0_18 = arith.constant 0 : index
      %c0_19 = arith.constant 0 : index
      %34 = vector.load %arg4[%c0_18, %c0_19] : memref<1x32xf32, #tpu.memory_space<vmem>>, vector<1x32xf32>
      %35 = vector.broadcast %34 : vector<1x32xf32> to vector<8x32xf32>
      %36 = arith.addf %33, %35 : vector<8x32xf32>
      %c0_20 = arith.constant 0 : index
      %c0_21 = arith.constant 0 : index
      %37 = vector.load %arg8[%c0_20, %c0_21] : memref<8x32xf32, #tpu.memory_space<vmem>>, vector<8x32xf32>
      tpu.vector_store %arg8[%c0_20, %c0_21], %36 {strides = array<i32>} : memref<8x32xf32, #tpu.memory_space<vmem>>, vector<8x32xf32>,
    } else {
    }
    %c0 = arith.constant 0 : index
    %c0_1 = arith.constant 0 : index
    %3 = vector.load %arg8[%c0, %c0_1] : memref<8x32xf32, #tpu.memory_space<vmem>>, vector<8x32xf32>
    %c0_2 = arith.constant 0 : index
    %c0_3 = arith.constant 0 : index
    %4 = vector.load %arg5[%c0_2, %c0_3] : memref<32x32xf32, #tpu.memory_space<vmem>>, vector<32x32xf32>
    %cst = arith.constant dense<0.000000e+00> : vector<8x32xf32>
    %5 = tpu.matmul %3, %4, %cst {dimension_numbers = #tpu.dot_dimension_numbers<[1], [0], [0], [1], [0, 0, 1, 1], [], []>} : vector<8x32xf32>, vector<32x32xf32>, vector<8x32xf32> -> vector<8x32xf32>
    %c0_4 = arith.constant 0 : index
    %c0_5 = arith.constant 0 : index
    %6 = vector.load %arg6[%c0_4, %c0_5] : memref<1x32xf32, #tpu.memory_space<vmem>>, vector<1x32xf32>
    %7 = vector.broadcast %6 : vector<1x32xf32> to vector<8x32xf32>
    %8 = arith.addf %5, %7 : vector<8x32xf32>
    %c0_6 = arith.constant 0 : index
    %c0_7 = arith.constant 0 : index
    %9 = vector.load %arg7[%c0_6, %c0_7] : memref<8x32xf32, #tpu.memory_space<vmem>>, vector<8x32xf32>
    tpu.vector_store %arg7[%c0_6, %c0_7], %8 {strides = array<i32>} : memref<8x32xf32, #tpu.memory_space<vmem>>, vector<8x32xf32>,
    return
  }
  func.func @transform_0(%arg0: i32, %arg1: i32) -> (i32, i32) {
    %c0_i32 = arith.constant 0 : i32
    %c0_i32_0 = arith.constant 0 : i32
    return %arg0, %c0_i32 : i32, i32
  }
  func.func @transform_1(%arg0: i32, %arg1: i32) -> (i32, i32) {
    %c0_i32 = arith.constant 0 : i32
    %c0_i32_0 = arith.constant 0 : i32
    %c0_i32_1 = arith.constant 0 : i32
    return %c0_i32, %c0_i32_0 : i32, i32
  }
  func.func @transform_2(%arg0: i32, %arg1: i32) -> (i32, i32) {
    %c0_i32 = arith.constant 0 : i32
    %c0_i32_0 = arith.constant 0 : i32
    %c0_i32_1 = arith.constant 0 : i32
    return %c0_i32, %c0_i32_0 : i32, i32
  }
  func.func @transform_3(%arg0: i32, %arg1: i32) -> (i32, i32) {
    %c0_i32 = arith.constant 0 : i32
    %c0_i32_0 = arith.constant 0 : i32
    return %c0_i32, %arg1 : i32, i32
  }
  func.func @transform_4(%arg0: i32, %arg1: i32) -> (i32, i32) {
    %c0_i32 = arith.constant 0 : i32
    %c0_i32_0 = arith.constant 0 : i32
    return %c0_i32, %arg1 : i32, i32
  }
  func.func @transform_5(%arg0: i32, %arg1: i32) -> (i32, i32) {
    %c0_i32 = arith.constant 0 : i32
    return %arg0, %arg1 : i32, i32
  }
}

</mosaic_0001>

<llo_original>
// kernel: _prenorm_impl.1
$region0: #{_prenorm_impl.1}
  #allocation0 [shape = 'u32[]', space=smem, size = 0x4, offset = 0x4, fixed_abs, tag = 'smem constant byte address 0x4 - core index']
  #allocation1 [shape = 'u32[72,128]{1,0:T(1,128)}', space=vmem, size = 0x9000, scoped, tag = 'internal scratch']
  #allocation2 [shape = 'f32[8,32]{1,0:T(8,128)}', space=vmem, size = 0x1000, scoped, tag = 'scratch operand']
  %s0 = inlined_call_operand.vmem [shape: f32[16,32], index: 0, kind: input, shape index: {}]
  %s1 = inlined_call_operand.vmem [shape: f32[1,32], index: 1, kind: input, shape index: {}]
  %s2 = inlined_call_operand.vmem [shape: f32[1,32], index: 2, kind: input, shape index: {}]
  %s3 = inlined_call_operand.vmem [shape: f32[32,32], index: 3, kind: input, shape index: {}]
  %s4 = inlined_call_operand.vmem [shape: f32[1,32], index: 4, kind: input, shape index: {}]
  %s5 = inlined_call_operand.hbm [shape: f32[16,32], index: 5, kind: output, shape index: {}]
  %s6 = sld [smem:[#allocation0]]
  $region57: #{_prenorm_impl.1} parent=0
    _
  %s8 = ssub.s32 1, %s6
  %s9 = scalar_select 0, %s8, %s6
  $region1: #{_prenorm_impl.1} parent=0
    #allocation3 [shape = 'u8[8192]{0}', space=vmem, size = 0x2000, scoped, tag = 'output window, operand 0']
    #allocation4 [shape = 's32[2]{0}', space=sflag, size = 0x8, scoped, tag = 'scoped memory for _prenorm_impl.1']
    %10 = vsyncpa [#allocation4], 0
    %s11 = scalar_lea.sflag [#allocation4], 1
    %12 = vsyncpa %s11, 0
    loop: start=0, step=1, limit=4
    $region2: #{_prenorm_impl.1} parent=1 // loop_pre_header
      _
    $region3: #{_prenorm_impl.1} parent=1 // loop_header
      %s14 = sphi 0, %s18
      %p15 = scmp.ge.s32.totalorder %s14, 4
      %s21 = sphi 0, %s33
      %s22 = sphi 0, %s29
      %s23 = sphi 0, %s21
      %s24 = sphi 0, %s22
      %s25 = sphi 0, %s23
      %s26 = sphi 0, %s24
      %s36 = sphi 0, %s38
      %s39 = sphi 0, %s36
      %s40 = sphi 0, %s39
      %s56 = sphi 0, %s40
      %s60 = sphi 0, %s60
      %s62 = sphi 0, %s60
      %s63 = sphi 0, %s62
      %s77 = sphi 0, %s63
      %s81 = sphi 0, %s81
      %s83 = sphi 0, %s81
      %s84 = sphi 0, %s83
      %s98 = sphi 0, %s84
      %s104 = sphi 0, %s106
      %s107 = sphi 0, %s104
      %s108 = sphi 0, %s107
      %s124 = sphi 0, %s108
      %s130 = sphi 0, %s132
      %s133 = sphi 0, %s130
      %s134 = sphi 0, %s133
      %s150 = sphi 0, %s134
      %s158 = sphi 0, %s160
      %s161 = sphi 0, %s158
      %s162 = sphi 0, %s161
      %s178 = sphi 0, %s162
    $region4: #{_prenorm_impl.1} parent=1 // loop_header_branch
      %17 = sbr.rel (%p15) target = $region8
    $region5: #{_prenorm_impl.1} parent=1 // loop_body
      %s19 = ssub.s32 %s14, 1
      %s20 = ssub.s32 %s14, 2
      %s27 = sadd.s32 1, %s22
      %p28 = scmp.ge.s32.totalorder %s27, 1
      %s29 = scalar_select %p28, 0, %s27
      %s30 = sadd.s32 1, %s21
      %s31 = scalar_select %p28, %s30, %s21
      %p32 = scmp.ge.s32.totalorder %s31, 2
      %s33 = scalar_select %p32, 0, %s31
      %s34 = ssub.s32 %s21, %s33
      %p35 = scmp.eq.s32.totalorder %s34, 0
      %s37 = sadd.s32 %s36, 1
      %s38 = scalar_select %p35, %s36, %s37
      %p41 = pneg %p35
      %p42 = scmp.eq.s32.totalorder %s14, 1
      %p43 = por %p41, %p42
      %p44 = scmp.ne.s32.totalorder %s36, %s39
      %p45 = scmp.eq.s32.totalorder %s14, 0
      %p46 = por %p44, %p45
      %p47 = scmp.ne.s32.totalorder %s36, %s39
      %p48 = scmp.eq.s32.totalorder %s19, 1
      %p49 = por %p47, %p48
      %p50 = scmp.ne.s32.totalorder %s39, %s40
      %p51 = scmp.eq.s32.totalorder %s19, 0
      %p52 = por %p50, %p51
      %p53 = scmp.ne.s32.totalorder %s39, %s40
      %p54 = scmp.eq.s32.totalorder %s20, 1
      %p55 = por %p53, %p54
      %p57 = scmp.ne.s32.totalorder %s40, %s56
      %p58 = scmp.eq.s32.totalorder %s20, 0
      %p59 = por %p57, %p58
      %s61 = sadd.s32 %s60, 1
      %p64 = scmp.eq.s32.totalorder %s14, 1
      %p65 = scmp.ne.s32.totalorder %s60, %s62
      %p66 = scmp.eq.s32.totalorder %s14, 0
      %p67 = por %p65, %p66
      %p68 = scmp.ne.s32.totalorder %s60, %s62
      %p69 = scmp.eq.s32.totalorder %s19, 1
      %p70 = por %p68, %p69
      %p71 = scmp.ne.s32.totalorder %s62, %s63
      %p72 = scmp.eq.s32.totalorder %s19, 0
      %p73 = por %p71, %p72
      %p74 = scmp.ne.s32.totalorder %s62, %s63
      %p75 = scmp.eq.s32.totalorder %s20, 1
      %p76 = por %p74, %p75
      %p78 = scmp.ne.s32.totalorder %s63, %s77
      %p79 = scmp.eq.s32.totalorder %s20, 0
      %p80 = por %p78, %p79
      %s82 = sadd.s32 %s81, 1
      %p85 = scmp.eq.s32.totalorder %s14, 1
      %p86 = scmp.ne.s32.totalorder %s81, %s83
      %p87 = scmp.eq.s32.totalorder %s14, 0
      %p88 = por %p86, %p87
      %p89 = scmp.ne.s32.totalorder %s81, %s83
      %p90 = scmp.eq.s32.totalorder %s19, 1
      %p91 = por %p89, %p90
      %p92 = scmp.ne.s32.totalorder %s83, %s84
      %p93 = scmp.eq.s32.totalorder %s19, 0
      %p94 = por %p92, %p93
      %p95 = scmp.ne.s32.totalorder %s83, %s84
      %p96 = scmp.eq.s32.totalorder %s20, 1
      %p97 = por %p95, %p96
      %p99 = scmp.ne.s32.totalorder %s84, %s98
      %p100 = scmp.eq.s32.totalorder %s20, 0
      %p101 = por %p99, %p100
      %s102 = ssub.s32 %s22, %s29
      %p103 = scmp.eq.s32.totalorder %s102, 0
      %s105 = sadd.s32 %s104, 1
      %s106 = scalar_select %p103, %s104, %s105
      %p109 = pneg %p103
      %p110 = scmp.eq.s32.totalorder %s14, 1
      %p111 = por %p109, %p110
      %p112 = scmp.ne.s32.totalorder %s104, %s107
      %p113 = scmp.eq.s32.totalorder %s14, 0
      %p114 = por %p112, %p113
      %p115 = scmp.ne.s32.totalorder %s104, %s107
      %p116 = scmp.eq.s32.totalorder %s19, 1
      %p117 = por %p115, %p116
      %p118 = scmp.ne.s32.totalorder %s107, %s108
      %p119 = scmp.eq.s32.totalorder %s19, 0
      %p120 = por %p118, %p119
      %p121 = scmp.ne.s32.totalorder %s107, %s108
      %p122 = scmp.eq.s32.totalorder %s20, 1
      %p123 = por %p121, %p122
      %p125 = scmp.ne.s32.totalorder %s108, %s124
      %p126 = scmp.eq.s32.totalorder %s20, 0
      %p127 = por %p125, %p126
      %s128 = ssub.s32 %s22, %s29
      %p129 = scmp.eq.s32.totalorder %s128, 0
      %s131 = sadd.s32 %s130, 1
      %s132 = scalar_select %p129, %s130, %s131
      %p135 = pneg %p129
      %p136 = scmp.eq.s32.totalorder %s14, 1
      %p137 = por %p135, %p136
      %p138 = scmp.ne.s32.totalorder %s130, %s133
      %p139 = scmp.eq.s32.totalorder %s14, 0
      %p140 = por %p138, %p139
      %p141 = scmp.ne.s32.totalorder %s130, %s133
      %p142 = scmp.eq.s32.totalorder %s19, 1
      %p143 = por %p141, %p142
      %p144 = scmp.ne.s32.totalorder %s133, %s134
      %p145 = scmp.eq.s32.totalorder %s19, 0
      %p146 = por %p144, %p145
      %p147 = scmp.ne.s32.totalorder %s133, %s134
      %p148 = scmp.eq.s32.totalorder %s20, 1
      %p149 = por %p147, %p148
      %p151 = scmp.ne.s32.totalorder %s134, %s150
      %p152 = scmp.eq.s32.totalorder %s20, 0
      %p153 = por %p151, %p152
      %s154 = ssub.s32 %s21, %s33
      %s155 = ssub.s32 %s22, %s29
      %s156 = sor.u32 %s154, %s155
      %p157 = scmp.eq.s32.totalorder %s156, 0
      %s159 = sadd.s32 %s158, 1
      %s160 = scalar_select %p157, %s158, %s159
      %p163 = pneg %p157
      %p164 = scmp.eq.s32.totalorder %s14, 1
      %p165 = por %p163, %p164
      %p166 = scmp.ne.s32.totalorder %s158, %s161
      %p167 = scmp.eq.s32.totalorder %s14, 0
      %p168 = por %p166, %p167
      %p169 = scmp.ne.s32.totalorder %s158, %s161
      %p170 = scmp.eq.s32.totalorder %s19, 1
      %p171 = por %p169, %p170
      %p172 = scmp.ne.s32.totalorder %s161, %s162
      %p173 = scmp.eq.s32.totalorder %s19, 0
      %p174 = por %p172, %p173
      %p175 = scmp.ne.s32.totalorder %s161, %s162
      %p176 = scmp.eq.s32.totalorder %s20, 1
      %p177 = por %p175, %p176
      %p179 = scmp.ne.s32.totalorder %s162, %s178
      %p180 = scmp.eq.s32.totalorder %s20, 0
      %p181 = por %p179, %p180
      %p182 = scmp.le.s32.totalorder 1, %s14
      %p183 = scmp.lt.s32.totalorder %s14, 3
      %p184 = pnand %p182, %p183
      %p185 = pneg %p184
      // Predicated region
      $region9: #{_prenorm_impl.1} parent=5 // pred_check
        _
      $region10: #{_prenorm_impl.1} parent=5 // pred_check_branch
        %187 = sbr.rel (%p184) target = $region12
      $region11: #{_prenorm_impl.1} parent=5 // pred_region
        %s188 = ssub.s32 %s14, 1
        // Predicated region
        $region13: #{_prenorm_impl.1} parent=11 // pred_check
          %p189 = pneg %p73
        $region14: #{_prenorm_impl.1} parent=11 // pred_check_branch
          %191 = sbr.rel (%p189) target = $region16
        $region15: #{_prenorm_impl.1} parent=11 // pred_region
          _
        $region16: #{_prenorm_impl.1} parent=11 // pred_fallthru
          _
        // Predicated region
        $region17: #{_prenorm_impl.1} parent=11 // pred_check
          %p192 = pneg %p94
        $region18: #{_prenorm_impl.1} parent=11 // pred_check_branch
          %194 = sbr.rel (%p192) target = $region20
        $region19: #{_prenorm_impl.1} parent=11 // pred_region
          _
        $region20: #{_prenorm_impl.1} parent=11 // pred_fallthru
          _
        // Predicated region
        $region21: #{_prenorm_impl.1} parent=11 // pred_check
          %p195 = pneg %p120
        $region22: #{_prenorm_impl.1} parent=11 // pred_check_branch
          %197 = sbr.rel (%p195) target = $region24
        $region23: #{_prenorm_impl.1} parent=11 // pred_region
          %p198 = scmp.lt.s32.totalorder %s24, 0
          %s199 = scalar_select %p198, %s24, 0
          %s200 = smul.addr %s199, 8
          %s201 = scalar_lea.vmem %s3, %s200
        $region24: #{_prenorm_impl.1} parent=11 // pred_fallthru
          _
        // Predicated region
        $region25: #{_prenorm_impl.1} parent=11 // pred_check
          %p202 = pneg %p146
        $region26: #{_prenorm_impl.1} parent=11 // pred_check_branch
          %204 = sbr.rel (%p202) target = $region28
        $region27: #{_prenorm_impl.1} parent=11 // pred_region
          %p205 = scmp.lt.s32.totalorder %s24, 0
          %s206 = scalar_select %p205, %s24, 0
          %s207 = scalar_lea.vmem %s4, %s206
        $region28: #{_prenorm_impl.1} parent=11 // pred_fallthru
          _
      $region12: #{_prenorm_impl.1} parent=5 // pred_fallthru
        _
      %p208 = scmp.lt.s32.totalorder %s14, 2
      // Predicated region
      $region29: #{_prenorm_impl.1} parent=5 // pred_check
        %p209 = pneg %p208
      $region30: #{_prenorm_impl.1} parent=5 // pred_check_branch
        %211 = sbr.rel (%p209) target = $region32
      $region31: #{_prenorm_impl.1} parent=5 // pred_region
        // Predicated region
        $region33: #{_prenorm_impl.1} parent=31 // pred_check
          %p212 = pneg %p46
        $region34: #{_prenorm_impl.1} parent=31 // pred_check_branch
          %214 = sbr.rel (%p212) target = $region36
        $region35: #{_prenorm_impl.1} parent=31 // pred_region
          %p215 = scmp.lt.s32.totalorder %s21, 1
          %s216 = scalar_select %p215, %s21, 1
          %s217 = smul.addr %s216, 8
          %s218 = scalar_lea.vmem %s0, %s217
        $region36: #{_prenorm_impl.1} parent=31 // pred_fallthru
          _
      $region32: #{_prenorm_impl.1} parent=5 // pred_fallthru
        _
      %p219 = scmp.le.s32.totalorder 1, %s14
      %p220 = scmp.lt.s32.totalorder %s14, 3
      %p221 = pnand %p219, %p220
      %p222 = pneg %p221
      // Predicated region
      $region37: #{_prenorm_impl.1} parent=5 // pred_check
        _
      $region38: #{_prenorm_impl.1} parent=5 // pred_check_branch
        %224 = sbr.rel (%p221) target = $region40
      $region39: #{_prenorm_impl.1} parent=5 // pred_region
        %s225 = ssub.s32 %s14, 1
        %p226 = scmp.lt.s32.totalorder %s23, 1
        %s227 = scalar_select %p226, %s23, 1
        %s228 = smul.addr %s227, 8
        %s229 = scalar_lea.vmem %s0, %s228
        %p230 = pneg %p52
        %p231 = pneg %p49
        %p232 = pneg %p73
        %p233 = pneg %p70
        %p234 = pneg %p94
        %p235 = pneg %p91
        %p236 = scmp.lt.s32.totalorder %s24, 0
        %s237 = scalar_select %p236, %s24, 0
        %s238 = smul.addr %s237, 8
        %s239 = scalar_lea.vmem %s3, %s238
        %p240 = pneg %p120
        %p241 = pneg %p117
        %p242 = scmp.lt.s32.totalorder %s24, 0
        %s243 = scalar_select %p242, %s24, 0
        %s244 = scalar_lea.vmem %s4, %s243
        %p245 = pneg %p146
        %p246 = pneg %p143
        %p247 = pneg %p174
        %p248 = pneg %p171
        %s249 = sand.u32 %s161, 1
        %s250 = scalar_lea.sflag [#allocation4], %s249
        %s251 = sand.u32 %s161, 1
        %s252 = smul.addr %s251, 8
        %s253 = scalar_lea.vmem [#allocation3], %s252
        %p254 = scmp.lt.s32.totalorder %s23, 1
        %s255 = scalar_select %p254, %s23, 1
        %s256 = smul.addr %s255, 8
        %s257 = scalar_lea.vmem %s0, %s256
        %p258 = scmp.lt.s32.totalorder %s24, 0
        %s259 = scalar_select %p258, %s24, 0
        %s260 = smul.addr %s259, 8
        %s261 = scalar_lea.vmem %s3, %s260
        %p262 = scmp.lt.s32.totalorder %s24, 0
        %s263 = scalar_select %p262, %s24, 0
        %s264 = scalar_lea.vmem %s4, %s263
        %p265 = scmp.eq.s32.totalorder %s24, 0
        // Predicated region
        $region41: #{_prenorm_impl.1} parent=39 // pred_check
          %p266 = pneg %p265
        $region42: #{_prenorm_impl.1} parent=39 // pred_check_branch
          %268 = sbr.rel (%p266) target = $region44
        $region43: #{_prenorm_impl.1} parent=39 // pred_region
          %v269 = vld [vmem:[%s257] sm:$0xff]
          %vm270 = vcmask 261120
          %v271 = vsel %vm270, %v269, 0.0
          %272 = vadd.xlane.f32.xlu0 %v271
          %v273 = vpop.xlane.xlu0 %272
          %v274 = vrcp.pop 32.0
          %v275 = vmul.f32 32.0, %v274
          %v276 = vsub.f32 1.0, %v275
          %v277 = vmul.f32 %v274, %v276
          %v278 = vadd.f32 %v274, %v277
          %vm279 = vweird.f32 %v274
          %v280 = vsel %vm279, %v274, %v278
          %v281 = vmul.f32 %v273, %v280
          %v282 = vmul.f32 %v269, %v269
          %v283 = vsel %vm270, %v282, 0.0
          %284 = vadd.xlane.f32.xlu0 %v283
          %v285 = vpop.xlane.xlu0 %284
          %v286 = vmul.f32 %v285, %v280
          %v287 = vmul.f32 %v281, %v281
          %v288 = vsub.f32 %v286, %v287
          %v289 = vmax.f32 %v288, 0.0
          %v290 = vadd.f32 %v289, 1e-05
          %v291 = vrsqrt.pop %v290
          %v292 = vmul.f32 %v291, %v290
          %v293 = vmul.f32 %v292, %v291
          %v294 = vmul.f32 0.5, %v293
          %v295 = vsub.f32 1.5, %v294
          %v296 = vmul.f32 %v291, %v295
          %vm297 = vweird.f32 %v290
          %vm298 = vweird.f32 %v291
          %vm299 = vmor %vm297, %vm298
          %v300 = vsel %vm299, %v291, %v296
          %v301 = vsub.f32 %v269, %v281
          %v302 = vmul.f32 %v301, %v300
          %v303 = vld [vmem:[%s1] sm:$0x1]
          %v305 = vperm.slane %v303, 0
          %v307 = vmul.f32 %v302, %v305
          %v308 = vld [vmem:[%s2] sm:$0x1]
          %v310 = vperm.slane %v308, 0
          %v312 = vadd.f32 %v307, %v310
          %313 = vst.msk [vmem:[#allocation2] sm:$0xff] %vm270, %v312
        $region44: #{_prenorm_impl.1} parent=39 // pred_fallthru
          _
        %v314 = vld [vmem:[#allocation2] sm:$0xff]
        %v315 = vld [vmem:[%s261] sm:$0xff]
        %v316 = vld [vmem:[%s261 + $0x8] sm:$0xff]
        %v317 = vld [vmem:[%s261 + $0x10] sm:$0xff]
        %v318 = vld [vmem:[%s261 + $0x18] sm:$0xff]
        %v319 = vld [vmem:[%s264] sm:$0x1]
        %v321 = vperm.slane %v319, 0
        %vm323 = vcmask 261120
        %v325 = vsel %vm323, %v314, 0
        %327 = vmatpush.msra.mxu0 0.0
        %328 = vmatpush.msra.mxu0 0.0
        %329 = vmatpush.msra.mxu0 0.0
        %330 = vmatpush.msra.mxu0 0.0
        %331 = vmatpush.msra.mxu0 0.0
        %332 = vmatpush.msra.mxu0 0.0
        %333 = vmatpush.msra.mxu0 0.0
        %334 = vmatpush.msra.mxu0 0.0
        %335 = vmatpush.msra.mxu0 0.0
        %336 = vmatpush.msra.mxu0 0.0
        %337 = vmatpush.msra.mxu0 0.0
        %338 = vmatpush.msra.mxu0 0.0
        %339 = vmatpush.msra.mxu0 %v318
        %340 = vmatpush.msra.mxu0 %v317
        %341 = vmatpush.msra.mxu0 %v316
        %342 = vmatpush.msra.mxu0 %v315
        %343 = vmatmul.f32.gmra.mxu0 %v325
        %v344 = vpop.f32.mrf.mxu0
        %v345 = vadd.f32 %v321, %v344
        %346 = vdwg.mxu0
        %347 = vst.msk [vmem:[%s253] sm:$0xff] %vm323, %v345
        %s348 = sand.u32 %s161, 1
        %s349 = scalar_lea.sflag [#allocation4], %s348
        %s350 = sand.u32 %s161, 1
        %s351 = smul.addr %s350, 8
        %s352 = scalar_lea.vmem [#allocation3], %s351
        // Predicated region
        $region45: #{_prenorm_impl.1} parent=39 // pred_check
          %p353 = pneg %p171
        $region46: #{_prenorm_impl.1} parent=39 // pred_check_branch
          %355 = sbr.rel (%p353) target = $region48
        $region47: #{_prenorm_impl.1} parent=39 // pred_region
          %357 = vsyncadd %s349, 0
          %s358 = sadd.s32 %s24, %s23
          %s359 = smul.addr %s358, 8
          %s360 = scalar_lea.hbm %s5, %s359
          %s362 = sshll.u32 %s352, 4
          %s363 = int_to_ptr.vmem [resolvable:$true] %s362
          %s364 = sshll.u32 %s360, 4
          %s365 = int_to_ptr.hbm [resolvable:$true] %s364
          %367 = dma.vmem_to_hbm [thread:$0]  %s363, 128, %s365, %s349
        $region48: #{_prenorm_impl.1} parent=39 // pred_fallthru
          _
      $region40: #{_prenorm_impl.1} parent=5 // pred_fallthru
        _
      %p368 = scmp.le.s32.totalorder 2, %s14
      // Predicated region
      $region49: #{_prenorm_impl.1} parent=5 // pred_check
        %p369 = pneg %p368
      $region50: #{_prenorm_impl.1} parent=5 // pred_check_branch
        %371 = sbr.rel (%p369) target = $region52
      $region51: #{_prenorm_impl.1} parent=5 // pred_region
        %s372 = ssub.s32 %s14, 2
        // Predicated region
        $region53: #{_prenorm_impl.1} parent=51 // pred_check
          %p373 = pneg %p177
        $region54: #{_prenorm_impl.1} parent=51 // pred_check_branch
          %375 = sbr.rel (%p373) target = $region56
        $region55: #{_prenorm_impl.1} parent=51 // pred_region
          %s376 = sand.u32 %s162, 1
          %s377 = scalar_lea.sflag [#allocation4], %s376
          %s378 = sand.u32 %s162, 1
          %s379 = smul.addr %s378, 8
          %s380 = scalar_lea.vmem [#allocation3], %s379
          %382 = dma.done %s377, 128
        $region56: #{_prenorm_impl.1} parent=51 // pred_fallthru
          _
      $region52: #{_prenorm_impl.1} parent=5 // pred_fallthru
        _
    $region6: #{_prenorm_impl.1} parent=1 // loop_footer
      %s18 = sadd.s32 1, %s14
    $region7: #{_prenorm_impl.1} parent=1 // loop_footer_branch
      %13 = sbr.rel target = $region3
    $region8: #{_prenorm_impl.1} parent=1 // loop_exit
      _
    %383 = vsyncpa [#allocation4], 1
    %s384 = scalar_lea.sflag [#allocation4], 1
    %385 = vsyncpa %s384, 1

// kernel: _prenorm_impl.1
$region0: #{_prenorm_impl.1}
  #allocation0 [shape = 'u32[]', space=smem, size = 0x4, offset = 0x4, fixed_abs, tag = 'smem constant byte address 0x4 - core index']
  #allocation1 [shape = 'u32[72,128]{1,0:T(1,128)}', space=vmem, size = 0x9000, scoped, tag = 'internal scratch']
  #allocation2 [shape = 'f32[8,32]{1,0:T(8,128)}', space=vmem, size = 0x1000, scoped, tag = 'scratch operand']
  %s0 = inlined_call_operand.vmem [shape: f32[16,32], index: 0, kind: input, shape index: {}]
  %s1 = inlined_call_operand.vmem [shape: f32[1,32], index: 1, kind: input, shape index: {}]
  %s2 = inlined_call_operand.vmem [shape: f32[1,32], index: 2, kind: input, shape index: {}]
  %s3 = inlined_call_operand.vmem [shape: f32[32,32], index: 3, kind: input, shape index: {}]
  %s4 = inlined_call_operand.vmem [shape: f32[1,32], index: 4, kind: input, shape index: {}]
  %s5 = inlined_call_operand.hbm [shape: f32[16,32], index: 5, kind: output, shape index: {}]
  %s6 = sld [smem:[#allocation0]]
  $region57: #{_prenorm_impl.1} parent=0
    _
  %s8 = ssub.s32 1, %s6
  %s9 = scalar_select 0, %s8, %s6
  $region1: #{_prenorm_impl.1} parent=0
    #allocation3 [shape = 'u8[8192]{0}', space=vmem, size = 0x2000, scoped, tag = 'output window, operand 0']
    #allocation4 [shape = 's32[2]{0}', space=sflag, size = 0x8, scoped, tag = 'scoped memory for _prenorm_impl.1']
    %10 = vsyncpa [#allocation4], 0
    %s11 = scalar_lea.sflag [#allocation4], 1
    %12 = vsyncpa %s11, 0
    loop: start=0, step=1, limit=4
    $region2: #{_prenorm_impl.1} parent=1 // loop_pre_header
      _
    $region3: #{_prenorm_impl.1} parent=1 // loop_header
      %s14 = sphi 0, %s18
      %p15 = scmp.ge.s32.totalorder %s14, 4
      %s21 = sphi 0, %s33
      %s22 = sphi 0, %s29
      %s23 = sphi 0, %s21
      %s24 = sphi 0, %s22
      %s25 = sphi 0, %s23
      %s26 = sphi 0, %s24
      %s36 = sphi 0, %s38
      %s39 = sphi 0, %s36
      %s40 = sphi 0, %s39
      %s56 = sphi 0, %s40
      %s60 = sphi 0, %s60
      %s62 = sphi 0, %s60
      %s63 = sphi 0, %s62
      %s77 = sphi 0, %s63
      %s81 = sphi 0, %s81
      %s83 = sphi 0, %s81
      %s84 = sphi 0, %s83
      %s98 = sphi 0, %s84
      %s104 = sphi 0, %s106
      %s107 = sphi 0, %s104
      %s108 = sphi 0, %s107
      %s124 = sphi 0, %s108
      %s130 = sphi 0, %s132
      %s133 = sphi 0, %s130
      %s134 = sphi 0, %s133
      %s150 = sphi 0, %s134
      %s158 = sphi 0, %s160
      %s161 = sphi 0, %s158
      %s162 = sphi 0, %s161
      %s178 = sphi 0, %s162
    $region4: #{_prenorm_impl.1} parent=1 // loop_header_branch
      %17 = sbr.rel (%p15) target = $region8
    $region5: #{_prenorm_impl.1} parent=1 // loop_body
      %s19 = ssub.s32 %s14, 1
      %s20 = ssub.s32 %s14, 2
      %s27 = sadd.s32 1, %s22
      %p28 = scmp.ge.s32.totalorder %s27, 1
      %s29 = scalar_select %p28, 0, %s27
      %s30 = sadd.s32 1, %s21
      %s31 = scalar_select %p28, %s30, %s21
      %p32 = scmp.ge.s32.totalorder %s31, 2
      %s33 = scalar_select %p32, 0, %s31
      %s34 = ssub.s32 %s21, %s33
      %p35 = scmp.eq.s32.totalorder %s34, 0
      %s37 = sadd.s32 %s36, 1
      %s38 = scalar_select %p35, %s36, %s37
      %p41 = pneg %p35
      %p42 = scmp.eq.s32.totalorder %s14, 1
      %p43 = por %p41, %p42
      %p44 = scmp.ne.s32.totalorder %s36, %s39
      %p45 = scmp.eq.s32.totalorder %s14, 0
      %p46 = por %p44, %p45
      %p47 = scmp.ne.s32.totalorder %s36, %s39
      %p48 = scmp.eq.s32.totalorder %s19, 1
      %p49 = por %p47, %p48
      %p50 = scmp.ne.s32.totalorder %s39, %s40
      %p51 = scmp.eq.s32.totalorder %s19, 0
      %p52 = por %p50, %p51
      %p53 = scmp.ne.s32.totalorder %s39, %s40
      %p54 = scmp.eq.s32.totalorder %s20, 1
      %p55 = por %p53, %p54
      %p57 = scmp.ne.s32.totalorder %s40, %s56
      %p58 = scmp.eq.s32.totalorder %s20, 0
      %p59 = por %p57, %p58
      %s61 = sadd.s32 %s60, 1
      %p64 = scmp.eq.s32.totalorder %s14, 1
      %p65 = scmp.ne.s32.totalorder %s60, %s62
      %p66 = scmp.eq.s32.totalorder %s14, 0
      %p67 = por %p65, %p66
      %p68 = scmp.ne.s32.totalorder %s60, %s62
      %p69 = scmp.eq.s32.totalorder %s19, 1
      %p70 = por %p68, %p69
      %p71 = scmp.ne.s32.totalorder %s62, %s63
      %p72 = scmp.eq.s32.totalorder %s19, 0
      %p73 = por %p71, %p72
      %p74 = scmp.ne.s32.totalorder %s62, %s63
      %p75 = scmp.eq.s32.totalorder %s20, 1
      %p76 = por %p74, %p75
      %p78 = scmp.ne.s32.totalorder %s63, %s77
      %p79 = scmp.eq.s32.totalorder %s20, 0
      %p80 = por %p78, %p79
      %s82 = sadd.s32 %s81, 1
      %p85 = scmp.eq.s32.totalorder %s14, 1
      %p86 = scmp.ne.s32.totalorder %s81, %s83
      %p87 = scmp.eq.s32.totalorder %s14, 0
      %p88 = por %p86, %p87
      %p89 = scmp.ne.s32.totalorder %s81, %s83
      %p90 = scmp.eq.s32.totalorder %s19, 1
      %p91 = por %p89, %p90
      %p92 = scmp.ne.s32.totalorder %s83, %s84
      %p93 = scmp.eq.s32.totalorder %s19, 0
      %p94 = por %p92, %p93
      %p95 = scmp.ne.s32.totalorder %s83, %s84
      %p96 = scmp.eq.s32.totalorder %s20, 1
      %p97 = por %p95, %p96
      %p99 = scmp.ne.s32.totalorder %s84, %s98
      %p100 = scmp.eq.s32.totalorder %s20, 0
      %p101 = por %p99, %p100
      %s102 = ssub.s32 %s22, %s29
      %p103 = scmp.eq.s32.totalorder %s102, 0
      %s105 = sadd.s32 %s104, 1
      %s106 = scalar_select %p103, %s104, %s105
      %p109 = pneg %p103
      %p110 = scmp.eq.s32.totalorder %s14, 1
      %p111 = por %p109, %p110
      %p112 = scmp.ne.s32.totalorder %s104, %s107
      %p113 = scmp.eq.s32.totalorder %s14, 0
      %p114 = por %p112, %p113
      %p115 = scmp.ne.s32.totalorder %s104, %s107
      %p116 = scmp.eq.s32.totalorder %s19, 1
      %p117 = por %p115, %p116
      %p118 = scmp.ne.s32.totalorder %s107, %s108
      %p119 = scmp.eq.s32.totalorder %s19, 0
      %p120 = por %p118, %p119
      %p121 = scmp.ne.s32.totalorder %s107, %s108
      %p122 = scmp.eq.s32.totalorder %s20, 1
      %p123 = por %p121, %p122
      %p125 = scmp.ne.s32.totalorder %s108, %s124
      %p126 = scmp.eq.s32.totalorder %s20, 0
      %p127 = por %p125, %p126
      %s128 = ssub.s32 %s22, %s29
      %p129 = scmp.eq.s32.totalorder %s128, 0
      %s131 = sadd.s32 %s130, 1
      %s132 = scalar_select %p129, %s130, %s131
      %p135 = pneg %p129
      %p136 = scmp.eq.s32.totalorder %s14, 1
      %p137 = por %p135, %p136
      %p138 = scmp.ne.s32.totalorder %s130, %s133
      %p139 = scmp.eq.s32.totalorder %s14, 0
      %p140 = por %p138, %p139
      %p141 = scmp.ne.s32.totalorder %s130, %s133
      %p142 = scmp.eq.s32.totalorder %s19, 1
      %p143 = por %p141, %p142
      %p144 = scmp.ne.s32.totalorder %s133, %s134
      %p145 = scmp.eq.s32.totalorder %s19, 0
      %p146 = por %p144, %p145
      %p147 = scmp.ne.s32.totalorder %s133, %s134
      %p148 = scmp.eq.s32.totalorder %s20, 1
      %p149 = por %p147, %p148
      %p151 = scmp.ne.s32.totalorder %s134, %s150
      %p152 = scmp.eq.s32.totalorder %s20, 0
      %p153 = por %p151, %p152
      %s154 = ssub.s32 %s21, %s33
      %s155 = ssub.s32 %s22, %s29
      %s156 = sor.u32 %s154, %s155
      %p157 = scmp.eq.s32.totalorder %s156, 0
      %s159 = sadd.s32 %s158, 1
      %s160 = scalar_select %p157, %s158, %s159
      %p163 = pneg %p157
      %p164 = scmp.eq.s32.totalorder %s14, 1
      %p165 = por %p163, %p164
      %p166 = scmp.ne.s32.totalorder %s158, %s161
      %p167 = scmp.eq.s32.totalorder %s14, 0
      %p168 = por %p166, %p167
      %p169 = scmp.ne.s32.totalorder %s158, %s161
      %p170 = scmp.eq.s32.totalorder %s19, 1
      %p171 = por %p169, %p170
      %p172 = scmp.ne.s32.totalorder %s161, %s162
      %p173 = scmp.eq.s32.totalorder %s19, 0
      %p174 = por %p172, %p173
      %p175 = scmp.ne.s32.totalorder %s161, %s162
      %p176 = scmp.eq.s32.totalorder %s20, 1
      %p177 = por %p175, %p176
      %p179 = scmp.ne.s32.totalorder %s162, %s178
      %p180 = scmp.eq.s32.totalorder %s20, 0
      %p181 = por %p179, %p180
      %p182 = scmp.le.s32.totalorder 1, %s14
      %p183 = scmp.lt.s32.totalorder %s14, 3
      %p184 = pnand %p182, %p183
      %p185 = pneg %p184
      // Predicated region
      $region9: #{_prenorm_impl.1} parent=5 // pred_check
        _
      $region10: #{_prenorm_impl.1} parent=5 // pred_check_branch
        %187 = sbr.rel (%p184) target = $region12
      $region11: #{_prenorm_impl.1} parent=5 // pred_region
        %s188 = ssub.s32 %s14, 1
        // Predicated region
        $region13: #{_prenorm_impl.1} parent=11 // pred_check
          %p189 = pneg %p73
        $region14: #{_prenorm_impl.1} parent=11 // pred_check_branch
          %191 = sbr.rel (%p189) target = $region16
        $region15: #{_prenorm_impl.1} parent=11 // pred_region
          _
        $region16: #{_prenorm_impl.1} parent=11 // pred_fallthru
          _
        // Predicated region
        $region17: #{_prenorm_impl.1} parent=11 // pred_check
          %p192 = pneg %p94
        $region18: #{_prenorm_impl.1} parent=11 // pred_check_branch
          %194 = sbr.rel (%p192) target = $region20
        $region19: #{_prenorm_impl.1} parent=11 // pred_region
          _
        $region20: #{_prenorm_impl.1} parent=11 // pred_fallthru
          _
        // Predicated region
        $region21: #{_prenorm_impl.1} parent=11 // pred_check
          %p195 = pneg %p120
        $region22: #{_prenorm_impl.1} parent=11 // pred_check_branch
          %197 = sbr.rel (%p195) target = $region24
        $region23: #{_prenorm_impl.1} parent=11 // pred_region
          %p198 = scmp.lt.s32.totalorder %s24, 0
          %s199 = scalar_select %p198, %s24, 0
          %s200 = smul.addr %s199, 8
          %s201 = scalar_lea.vmem %s3, %s200
        $region24: #{_prenorm_impl.1} parent=11 // pred_fallthru
          _
        // Predicated region
        $region25: #{_prenorm_impl.1} parent=11 // pred_check
          %p202 = pneg %p146
        $region26: #{_prenorm_impl.1} parent=11 // pred_check_branch
          %204 = sbr.rel (%p202) target = $region28
        $region27: #{_prenorm_impl.1} parent=11 // pred_region
          %p205 = scmp.lt.s32.totalorder %s24, 0
          %s206 = scalar_select %p205, %s24, 0
          %s207 = scalar_lea.vmem %s4, %s206
        $region28: #{_prenorm_impl.1} parent=11 // pred_fallthru
          _
      $region12: #{_prenorm_impl.1} parent=5 // pred_fallthru
        _
      %p208 = scmp.lt.s32.totalorder %s14, 2
      // Predicated region
      $region29: #{_prenorm_impl.1} parent=5 // pred_check
        %p209 = pneg %p208
      $region30: #{_prenorm_impl.1} parent=5 // pred_check_branch
        %211 = sbr.rel (%p209) target = $region32
      $region31: #{_prenorm_impl.1} parent=5 // pred_region
        // Predicated region
        $region33: #{_prenorm_impl.1} parent=31 // pred_check
          %p212 = pneg %p46
        $region34: #{_prenorm_impl.1} parent=31 // pred_check_branch
          %214 = sbr.rel (%p212) target = $region36
        $region35: #{_prenorm_impl.1} parent=31 // pred_region
          %p215 = scmp.lt.s32.totalorder %s21, 1
          %s216 = scalar_select %p215, %s21, 1
          %s217 = smul.addr %s216, 8
          %s218 = scalar_lea.vmem %s0, %s217
        $region36: #{_prenorm_impl.1} parent=31 // pred_fallthru
          _
      $region32: #{_prenorm_impl.1} parent=5 // pred_fallthru
        _
      %p219 = scmp.le.s32.totalorder 1, %s14
      %p220 = scmp.lt.s32.totalorder %s14, 3
      %p221 = pnand %p219, %p220
      %p222 = pneg %p221
      // Predicated region
      $region37: #{_prenorm_impl.1} parent=5 // pred_check
        _
      $region38: #{_prenorm_impl.1} parent=5 // pred_check_branch
        %224 = sbr.rel (%p221) target = $region40
      $region39: #{_prenorm_impl.1} parent=5 // pred_region
        %s225 = ssub.s32 %s14, 1
        %p226 = scmp.lt.s32.totalorder %s23, 1
        %s227 = scalar_select %p226, %s23, 1
        %s228 = smul.addr %s227, 8
        %s229 = scalar_lea.vmem %s0, %s228
        %p230 = pneg %p52
        %p231 = pneg %p49
        %p232 = pneg %p73
        %p233 = pneg %p70
        %p234 = pneg %p94
        %p235 = pneg %p91
        %p236 = scmp.lt.s32.totalorder %s24, 0
        %s237 = scalar_select %p236, %s24, 0
        %s238 = smul.addr %s237, 8
        %s239 = scalar_lea.vmem %s3, %s238
        %p240 = pneg %p120
        %p241 = pneg %p117
        %p242 = scmp.lt.s32.totalorder %s24, 0
        %s243 = scalar_select %p242, %s24, 0
        %s244 = scalar_lea.vmem %s4, %s243
        %p245 = pneg %p146
        %p246 = pneg %p143
        %p247 = pneg %p174
        %p248 = pneg %p171
        %s249 = sand.u32 %s161, 1
        %s250 = scalar_lea.sflag [#allocation4], %s249
        %s251 = sand.u32 %s161, 1
        %s252 = smul.addr %s251, 8
        %s253 = scalar_lea.vmem [#allocation3], %s252
        %p254 = scmp.lt.s32.totalorder %s23, 1
        %s255 = scalar_select %p254, %s23, 1
        %s256 = smul.addr %s255, 8
        %s257 = scalar_lea.vmem %s0, %s256
        %p258 = scmp.lt.s32.totalorder %s24, 0
        %s259 = scalar_select %p258, %s24, 0
        %s260 = smul.addr %s259, 8
        %s261 = scalar_lea.vmem %s3, %s260
        %p262 = scmp.lt.s32.totalorder %s24, 0
        %s263 = scalar_select %p262, %s24, 0
        %s264 = scalar_lea.vmem %s4, %s263
        %p265 = scmp.eq.s32.totalorder %s24, 0
        // Predicated region
        $region41: #{_prenorm_impl.1} parent=39 // pred_check
          %p266 = pneg %p265
        $region42: #{_prenorm_impl.1} parent=39 // pred_check_branch
          %268 = sbr.rel (%p266) target = $region44
        $region43: #{_prenorm_impl.1} parent=39 // pred_region
          %v269 = vld [vmem:[%s257] sm:$0xff]
          %vm270 = vcmask 261120
          %v271 = vsel %vm270, %v269, 0.0
          %272 = vadd.xlane.f32.xlu0 %v271
          %v273 = vpop.xlane.xlu0 %272
          %v274 = vrcp.pop 32.0
          %v275 = vmul.f32 32.0, %v274
          %v276 = vsub.f32 1.0, %v275
          %v277 = vmul.f32 %v274, %v276
          %v278 = vadd.f32 %v274, %v277
          %vm279 = vweird.f32 %v274
          %v280 = vsel %vm279, %v274, %v278
          %v281 = vmul.f32 %v273, %v280
          %v282 = vmul.f32 %v269, %v269
          %v283 = vsel %vm270, %v282, 0.0
          %284 = vadd.xlane.f32.xlu0 %v283
          %v285 = vpop.xlane.xlu0 %284
          %v286 = vmul.f32 %v285, %v280
          %v287 = vmul.f32 %v281, %v281
          %v288 = vsub.f32 %v286, %v287
          %v289 = vmax.f32 %v288, 0.0
          %v290 = vadd.f32 %v289, 1e-05
          %v291 = vrsqrt.pop %v290
          %v292 = vmul.f32 %v291, %v290
          %v293 = vmul.f32 %v292, %v291
          %v294 = vmul.f32 0.5, %v293
          %v295 = vsub.f32 1.5, %v294
          %v296 = vmul.f32 %v291, %v295
          %vm297 = vweird.f32 %v290
          %vm298 = vweird.f32 %v291
          %vm299 = vmor %vm297, %vm298
          %v300 = vsel %vm299, %v291, %v296
          %v301 = vsub.f32 %v269, %v281
          %v302 = vmul.f32 %v301, %v300
          %v303 = vld [vmem:[%s1] sm:$0x1]
          %v305 = vperm.slane %v303, 0
          %v307 = vmul.f32 %v302, %v305
          %v308 = vld [vmem:[%s2] sm:$0x1]
          %v310 = vperm.slane %v308, 0
          %v312 = vadd.f32 %v307, %v310
          %313 = vst.msk [vmem:[#allocation2] sm:$0xff] %vm270, %v312
        $region44: #{_prenorm_impl.1} parent=39 // pred_fallthru
          _
        %v314 = vld [vmem:[#allocation2] sm:$0xff]
        %v315 = vld [vmem:[%s261] sm:$0xff]
        %v316 = vld [vmem:[%s261 + $0x8] sm:$0xff]
        %v317 = vld [vmem:[%s261 + $0x10] sm:$0xff]
        %v318 = vld [vmem:[%s261 + $0x18] sm:$0xff]
        %v319 = vld [vmem:[%s264] sm:$0x1]
        %v321 = vperm.slane %v319, 0
        %vm323 = vcmask 261120
        %v325 = vsel %vm323, %v314, 0
        %327 = vmatpush.msra.mxu0 0.0
        %328 = vmatpush.msra.mxu0 0.0
        %329 = vmatpush.msra.mxu0 0.0
        %330 = vmatpush.msra.mxu0 0.0
        %331 = vmatpush.msra.mxu0 0.0
        %332 = vmatpush.msra.mxu0 0.0
        %333 = vmatpush.msra.mxu0 0.0
        %334 = vmatpush.msra.mxu0 0.0
        %335 = vmatpush.msra.mxu0 0.0
        %336 = vmatpush.msra.mxu0 0.0
        %337 = vmatpush.msra.mxu0 0.0
        %338 = vmatpush.msra.mxu0 0.0
        %339 = vmatpush.msra.mxu0 %v318
        %340 = vmatpush.msra.mxu0 %v317
        %341 = vmatpush.msra.mxu0 %v316
        %342 = vmatpush.msra.mxu0 %v315
        %343 = vmatmul.f32.gmra.mxu0 %v325
        %v344 = vpop.f32.mrf.mxu0
        %v345 = vadd.f32 %v321, %v344
        %346 = vdwg.mxu0
        %347 = vst.msk [vmem:[%s253] sm:$0xff] %vm323, %v345
        %s348 = sand.u32 %s161, 1
        %s349 = scalar_lea.sflag [#allocation4], %s348
        %s350 = sand.u32 %s161, 1
        %s351 = smul.addr %s350, 8
        %s352 = scalar_lea.vmem [#allocation3], %s351
        // Predicated region
        $region45: #{_prenorm_impl.1} parent=39 // pred_check
          %p353 = pneg %p171
        $region46: #{_prenorm_impl.1} parent=39 // pred_check_branch
          %355 = sbr.rel (%p353) target = $region48
        $region47: #{_prenorm_impl.1} parent=39 // pred_region
          %357 = vsyncadd %s349, 0
          %s358 = sadd.s32 %s24, %s23
          %s359 = smul.addr %s358, 8
          %s360 = scalar_lea.hbm %s5, %s359
          %s362 = sshll.u32 %s352, 4
          %s363 = int_to_ptr.vmem [resolvable:$true] %s362
          %s364 = sshll.u32 %s360, 4
          %s365 = int_to_ptr.hbm [resolvable:$true] %s364
          %367 = dma.vmem_to_hbm [thread:$0]  %s363, 128, %s365, %s349
        $region48: #{_prenorm_impl.1} parent=39 // pred_fallthru
          _
      $region40: #{_prenorm_impl.1} parent=5 // pred_fallthru
        _
      %p368 = scmp.le.s32.totalorder 2, %s14
      // Predicated region
      $region49: #{_prenorm_impl.1} parent=5 // pred_check
        %p369 = pneg %p368
      $region50: #{_prenorm_impl.1} parent=5 // pred_check_branch
        %371 = sbr.rel (%p369) target = $region52
      $region51: #{_prenorm_impl.1} parent=5 // pred_region
        %s372 = ssub.s32 %s14, 2
        // Predicated region
        $region53: #{_prenorm_impl.1} parent=51 // pred_check
          %p373 = pneg %p177
        $region54: #{_prenorm_impl.1} parent=51 // pred_check_branch
          %375 = sbr.rel (%p373) target = $region56
        $region55: #{_prenorm_impl.1} parent=51 // pred_region
          %s376 = sand.u32 %s162, 1
          %s377 = scalar_lea.sflag [#allocation4], %s376
          %s378 = sand.u32 %s162, 1
          %s379 = smul.addr %s378, 8
          %s380 = scalar_lea.vmem [#allocation3], %s379
          %382 = dma.done %s377, 128
        $region56: #{_prenorm_impl.1} parent=51 // pred_fallthru
          _
      $region52: #{_prenorm_impl.1} parent=5 // pred_fallthru
        _
    $region6: #{_prenorm_impl.1} parent=1 // loop_footer
      %s18 = sadd.s32 1, %s14
    $region7: #{_prenorm_impl.1} parent=1 // loop_footer_branch
      %13 = sbr.rel target = $region3
    $region8: #{_prenorm_impl.1} parent=1 // loop_exit
      _
    %383 = vsyncpa [#allocation4], 1
    %s384 = scalar_lea.sflag [#allocation4], 1
    %385 = vsyncpa %s384, 1

</llo_original>
